<compile_context>
chip_gen: v5e
topology: v5e:2x2
jax: 0.10.0
libtpu: 0.0.40
codegen_flags: <defaults>
</compile_context>

<pallas_src>
import functools

import jax
import jax.numpy as jnp
from jax.experimental import pallas as pl
from jax.experimental.pallas import tpu as pltpu


def _ffn_kernel(x_ref, w1_ref, b1_ref, w2_ref, b2_ref, o_ref, acc_ref):
    # x_ref:  (TM, d_model)        w1_ref: (d_model, TF)   b1_ref: (1, TF)
    # w2_ref: (TF, d_model)        b2_ref: (1, d_model)
    # o_ref:  (TM, d_model)        acc_ref: (TM, d_model) f32 scratch
    j = pl.program_id(1)

    @pl.when(j == 0)
    def _init():
        acc_ref[...] = jnp.zeros_like(acc_ref)

    # h = relu(x @ W1_chunk + b1_chunk), f32 accumulation on the MXU.
    h = jnp.dot(x_ref[...], w1_ref[...], preferred_element_type=jnp.float32)
    h = jnp.maximum(h + b1_ref[...].astype(jnp.float32), 0.0)
    # Dropout == identity in inference mode.

    # y += h @ W2_chunk  (accumulate this d_ff chunk's contribution).
    acc_ref[...] += jnp.dot(h.astype(w2_ref.dtype), w2_ref[...],
                            preferred_element_type=jnp.float32)

    @pl.when(j == pl.num_programs(1) - 1)
    def _finalize():
        o_ref[...] = (acc_ref[...] + b2_ref[...].astype(jnp.float32)).astype(o_ref.dtype)


def _round_up(v, m):
    return ((v + m - 1) // m) * m


def _footprint_bytes(tm, tf, d_model, itemsize):
    """Per-grid-step VMEM estimate for the chunked FFN kernel."""
    stream = 2 * 2 * tm * d_model * itemsize                  # x + out tiles, double-buffered
    wts = 2 * (2 * d_model * tf + tf + d_model) * itemsize    # W1/W2 chunks + biases, double-buffered
    acc = tm * d_model * 4                                    # resident f32 accumulator scratch
    interm = tm * tf * (4 + itemsize) + tm * d_model * 4      # f32 h, its cast copy, partial y
    return stream + wts + acc + interm


def _vmem_capacity_bytes():
    # Generation-aware capacity: 128 MiB (v5e/v6e), 64 MiB per TensorCore (v7x).
    try:
        return int(pltpu.get_tpu_info().vmem_capacity_bytes)
    except Exception:  # info query only; fall back to the most conservative value
        return 64 * 1024 * 1024


def _choose_tiles(n_rows, d_model, d_ff, itemsize, budget):
    """Pick (row_tile, d_ff_chunk) so the per-step VMEM footprint fits `budget`."""
    align = max(8, 32 // itemsize)          # sublane alignment: 8 (f32) / 16 (bf16)

    # d_ff chunk candidates, largest first: whole d_ff (weights stay resident),
    # then 128-aligned divisors (clean chunking, no garbage tail mixing into y).
    tf_cands = [d_ff] + [c for c in range(min(d_ff - 1, 4096), 127, -128)
                         if d_ff % c == 0]

    row_cap = max(_round_up(n_rows, align), align)
    tm = min(512, row_cap)                  # MXU-friendly default row tile

    def pick_tf(tm_):
        for c in tf_cands:
            if _footprint_bytes(tm_, c, d_model, itemsize) <= budget:
                return c
        return None

    tf = pick_tf(tm)
    while tf is None and tm > align:        # shrink rows until some chunk fits
        tm = max(align, _round_up(tm // 2, align))
        tf = pick_tf(tm)
    if tf is None:
        tf = tf_cands[-1]                   # best effort for pathological shapes

    # Grow the row tile while the budget allows (amortizes the ~0.35us/step grid
    # overhead; v6e's 128 MiB VMEM usually permits 1024+).
    for bigger in (1024, 2048):
        if bigger <= row_cap and _footprint_bytes(bigger, tf, d_model, itemsize) <= budget:
            tm = bigger

    # Small inputs: keep >=2 row-grid steps so both TensorCores get work on v7x.
    if tm >= n_rows and n_rows > align:
        tm = _round_up(pl.cdiv(n_rows, 2), align)
    if n_rows <= align:                     # tiny input: block == full row extent
        tm = n_rows

    return tm, tf


@functools.partial(jax.jit, static_argnames=("cast_to_bf16",))
def _ffn_impl(x, w1, b1, w2, b2, *, cast_to_bf16=False):
    batch, seq, d_model = x.shape
    d_ff = w1.shape[0]
    n_rows = batch * seq
    out_dtype = x.dtype

    # Optional bf16 compute (f32 accumulation kept): ~4x MXU rate + half the
    # weight VMEM on all generations.  Off by default to match PyTorch numerics.
    if cast_to_bf16:
        x = x.astype(jnp.bfloat16)
        w1 = w1.astype(jnp.bfloat16)
        w2 = w2.astype(jnp.bfloat16)

    itemsize = jnp.dtype(x.dtype).itemsize

    # TODO(synk): in a real integration, pre-transpose the weights once at
    # parameter-prep time; here a single XLA transpose per call keeps the kernel
    # dots in plain (M,K)@(K,N) form (no per-grid-step XLU transposes).
    w1t = w1.T                              # (d_model, d_ff)
    w2t = w2.T                              # (d_ff, d_model)
    b1r = b1.reshape(1, d_ff)
    b2r = b2.reshape(1, d_model)

    budget = int(0.85 * _vmem_capacity_bytes())
    tm, tf = _choose_tiles(n_rows, d_model, d_ff, itemsize, budget)
    fp = _footprint_bytes(tm, tf, d_model, itemsize)
    vmem_limit = int(min(budget, max(32 * 1024 * 1024, 1.5 * fp)))

    # No padding: Pallas masks the partial last row tile; rows are independent,
    # so garbage rows in the padded block never touch valid output.
    x2d = x.reshape(n_rows, d_model)
    grid = (pl.cdiv(n_rows, tm), d_ff // tf)

    out2d = pl.pallas_call(
        _ffn_kernel,
        out_shape=jax.ShapeDtypeStruct((n_rows, d_model), out_dtype),
        grid_spec=pltpu.PrefetchScalarGridSpec(
            num_scalar_prefetch=0,
            grid=grid,
            in_specs=[
                pl.BlockSpec((tm, d_model), lambda i, j: (i, 0)),   # x rows (resident across j)
                pl.BlockSpec((d_model, tf), lambda i, j: (0, j)),   # W1^T chunk (streams over j)
                pl.BlockSpec((1, tf), lambda i, j: (0, j)),         # b1 chunk
                pl.BlockSpec((tf, d_model), lambda i, j: (j, 0)),   # W2^T chunk (streams over j)
                pl.BlockSpec((1, d_model), lambda i, j: (0, 0)),    # b2 (resident)
            ],
            out_specs=pl.BlockSpec((tm, d_model), lambda i, j: (i, 0)),
            scratch_shapes=[pltpu.VMEM((tm, d_model), jnp.float32)],
        ),
        compiler_params=pltpu.CompilerParams(
            dimension_semantics=("parallel", "arbitrary"),   # rows shard across TCs
            vmem_limit_bytes=vmem_limit,
        ),
    )(x2d, w1t, b1r, w2t, b2r)

    return out2d.reshape(batch, seq, d_model)


def position_wise_ffn(x, w1, b1, w2, b2, *, cast_to_bf16=False):
    """FFN forward. x: (batch, seq, d_model); w1: (d_ff, d_model); w2: (d_model, d_ff)."""
    return _ffn_impl(x, w1, b1, w2, b2, cast_to_bf16=cast_to_bf16)


def _reference(x, w1, b1, w2, b2):
    h = jnp.maximum(jnp.einsum("bsd,fd->bsf", x, w1) + b1, 0.0)
    return jnp.einsum("bsf,df->bsd", h, w2) + b2


if __name__ == "__main__":
    batch, seq, d_model, d_ff = 2, 8, 32, 64

    key = jax.random.PRNGKey(0)
    kx, k1, k2, k3, k4 = jax.random.split(key, 5)

    x = jax.random.normal(kx, (batch, seq, d_model), dtype=jnp.float32)
    # nn.Linear-style deterministic init (uniform in +-1/sqrt(fan_in))
    lim1 = 1.0 / (d_model ** 0.5)
    lim2 = 1.0 / (d_ff ** 0.5)
    w1 = jax.random.uniform(k1, (d_ff, d_model), jnp.float32, -lim1, lim1)
    b1 = jax.random.uniform(k2, (d_ff,), jnp.float32, -lim1, lim1)
    w2 = jax.random.uniform(k3, (d_model, d_ff), jnp.float32, -lim2, lim2)
    b2 = jax.random.uniform(k4, (d_model,), jnp.float32, -lim2, lim2)

    out = jax.block_until_ready(position_wise_ffn(x, w1, b1, w2, b2))
    ref = _reference(x, w1, b1, w2, b2)
    assert out.shape == (batch, seq, d_model)
    assert jnp.allclose(out, ref, atol=1e-4, rtol=1e-4), "mismatch vs reference"

    # Exercise the partial last row tile (n_rows not a multiple of the row tile).
    x2 = jax.random.normal(jax.random.PRNGKey(1), (2, 7, d_model), dtype=jnp.float32)
    out2 = jax.block_until_ready(position_wise_ffn(x2, w1, b1, w2, b2))
    ref2 = _reference(x2, w1, b1, w2, b2)
    assert out2.shape == (2, 7, d_model)
    assert jnp.allclose(out2, ref2, atol=1e-4, rtol=1e-4), "partial-tile mismatch"

    print("KERNEL_OK")
</pallas_src>

<mosaic_0001>
module attributes {stable_mosaic.version = 11 : i64} {
  func.func @_ffn_kernel(%arg0: i32, %arg1: i32, %arg2: memref<8x32xf32, #tpu.memory_space<vmem>>, %arg3: memref<32x64xf32, #tpu.memory_space<vmem>>, %arg4: memref<1x64xf32, #tpu.memory_space<vmem>>, %arg5: memref<64x32xf32, #tpu.memory_space<vmem>>, %arg6: memref<1x32xf32, #tpu.memory_space<vmem>>, %arg7: memref<8x32xf32, #tpu.memory_space<vmem>>, %arg8: memref<8x32xf32, #tpu.memory_space<vmem>>) attributes {dimension_semantics = [#tpu.dimension_semantics<parallel>, #tpu.dimension_semantics<arbitrary>], iteration_bounds = array<i64: 2, 1>, scalar_prefetch = 0 : i64, scratch_operands = 1 : i64, tpu.core_type = #tpu.core_type<tc>, window_params = [{transform_indices = @transform_0, window_bounds = array<i64: 8, 32>}, {transform_indices = @transform_1, window_bounds = array<i64: 32, 64>}, {transform_indices = @transform_2, window_bounds = array<i64: 1, 64>}, {transform_indices = @transform_3, window_bounds = array<i64: 64, 32>}, {pipeline_mode = #tpu.pipeline_mode<synchronous>, transform_indices = @transform_4, window_bounds = array<i64: 1, 32>}, {transform_indices = @transform_5, window_bounds = array<i64: 8, 32>}]} {
    %c0_i32 = arith.constant 0 : i32
    %0 = arith.cmpi eq, %arg1, %c0_i32 : i32
    %1 = arith.extui %0 : i1 to i32
    %c0_i32_0 = arith.constant 0 : i32
    %2 = arith.cmpi ne, %1, %c0_i32_0 : i32
    scf.if %2 {
      %cst_16 = arith.constant 0.000000e+00 : f32
      %19 = vector.broadcast %cst_16 : f32 to vector<8x32xf32>
      %c0_17 = arith.constant 0 : index
      %c0_18 = arith.constant 0 : index
      %20 = vector.load %arg8[%c0_17, %c0_18] : memref<8x32xf32, #tpu.memory_space<vmem>>, vector<8x32xf32>
      tpu.vector_store %arg8[%c0_17, %c0_18], %19 {strides = array<i32>} : memref<8x32xf32, #tpu.memory_space<vmem>>, vector<8x32xf32>,
    } else {
    }
    %c0 = arith.constant 0 : index
    %c0_1 = arith.constant 0 : index
    %3 = vector.load %arg2[%c0, %c0_1] : memref<8x32xf32, #tpu.memory_space<vmem>>, vector<8x32xf32>
    %c0_2 = arith.constant 0 : index
    %c0_3 = arith.constant 0 : index
    %4 = vector.load %arg3[%c0_2, %c0_3] : memref<32x64xf32, #tpu.memory_space<vmem>>, vector<32x64xf32>
    %cst = arith.constant dense<0.000000e+00> : vector<8x64xf32>
    %5 = tpu.matmul %3, %4, %cst {dimension_numbers = #tpu.dot_dimension_numbers<[1], [0], [0], [1], [0, 0, 1, 1], [], []>} : vector<8x32xf32>, vector<32x64xf32>, vector<8x64xf32> -> vector<8x64xf32>
    %c0_4 = arith.constant 0 : index
    %c0_5 = arith.constant 0 : index
    %6 = vector.load %arg4[%c0_4, %c0_5] : memref<1x64xf32, #tpu.memory_space<vmem>>, vector<1x64xf32>
    %7 = vector.broadcast %6 : vector<1x64xf32> to vector<8x64xf32>
    %8 = arith.addf %5, %7 : vector<8x64xf32>
    %cst_6 = arith.constant 0.000000e+00 : f32
    %9 = vector.broadcast %cst_6 : f32 to vector<8x64xf32>
    %10 = arith.maximumf %8, %9 : vector<8x64xf32>
    %c0_7 = arith.constant 0 : index
    %c0_8 = arith.constant 0 : index
    %11 = vector.load %arg8[%c0_7, %c0_8] : memref<8x32xf32, #tpu.memory_space<vmem>>, vector<8x32xf32>
    %c0_9 = arith.constant 0 : index
    %c0_10 = arith.constant 0 : index
    %12 = vector.load %arg5[%c0_9, %c0_10] : memref<64x32xf32, #tpu.memory_space<vmem>>, vector<64x32xf32>
    %cst_11 = arith.constant dense<0.000000e+00> : vector<8x32xf32>
    %13 = tpu.matmul %10, %12, %cst_11 {dimension_numbers = #tpu.dot_dimension_numbers<[1], [0], [0], [1], [0, 0, 1, 1], [], []>} : vector<8x64xf32>, vector<64x32xf32>, vector<8x32xf32> -> vector<8x32xf32>
    %14 = arith.addf %11, %13 : vector<8x32xf32>
    %c0_12 = arith.constant 0 : index
    %c0_13 = arith.constant 0 : index
    %15 = vector.load %arg8[%c0_12, %c0_13] : memref<8x32xf32, #tpu.memory_space<vmem>>, vector<8x32xf32>
    tpu.vector_store %arg8[%c0_12, %c0_13], %14 {strides = array<i32>} : memref<8x32xf32, #tpu.memory_space<vmem>>, vector<8x32xf32>,
    %c0_i32_14 = arith.constant 0 : i32
    %16 = arith.cmpi eq, %arg1, %c0_i32_14 : i32
    %17 = arith.extui %16 : i1 to i32
    %c0_i32_15 = arith.constant 0 : i32
    %18 = arith.cmpi ne, %17, %c0_i32_15 : i32
    scf.if %18 {
      %c0_16 = arith.constant 0 : index
      %c0_17 = arith.constant 0 : index
      %19 = vector.load %arg8[%c0_16, %c0_17] : memref<8x32xf32, #tpu.memory_space<vmem>>, vector<8x32xf32>
      %c0_18 = arith.constant 0 : index
      %c0_19 = arith.constant 0 : index
      %20 = vector.load %arg6[%c0_18, %c0_19] : memref<1x32xf32, #tpu.memory_space<vmem>>, vector<1x32xf32>
      %21 = vector.broadcast %20 : vector<1x32xf32> to vector<8x32xf32>
      %22 = arith.addf %19, %21 : vector<8x32xf32>
      %c0_20 = arith.constant 0 : index
      %c0_21 = arith.constant 0 : index
      %23 = vector.load %arg7[%c0_20, %c0_21] : memref<8x32xf32, #tpu.memory_space<vmem>>, vector<8x32xf32>
      tpu.vector_store %arg7[%c0_20, %c0_21], %22 {strides = array<i32>} : memref<8x32xf32, #tpu.memory_space<vmem>>, vector<8x32xf32>,
    } else {
    }
    return
  }
  func.func @transform_0(%arg0: i32, %arg1: i32) -> (i32, i32) {
    %c0_i32 = arith.constant 0 : i32
    %c0_i32_0 = arith.constant 0 : i32
    return %arg0, %c0_i32 : i32, i32
  }
  func.func @transform_1(%arg0: i32, %arg1: i32) -> (i32, i32) {
    %c0_i32 = arith.constant 0 : i32
    %c0_i32_0 = arith.constant 0 : i32
    return %c0_i32, %arg1 : i32, i32
  }
  func.func @transform_2(%arg0: i32, %arg1: i32) -> (i32, i32) {
    %c0_i32 = arith.constant 0 : i32
    %c0_i32_0 = arith.constant 0 : i32
    return %c0_i32, %arg1 : i32, i32
  }
  func.func @transform_3(%arg0: i32, %arg1: i32) -> (i32, i32) {
    %c0_i32 = arith.constant 0 : i32
    %c0_i32_0 = arith.constant 0 : i32
    return %arg1, %c0_i32 : i32, i32
  }
  func.func @transform_4(%arg0: i32, %arg1: i32) -> (i32, i32) {
    %c0_i32 = arith.constant 0 : i32
    %c0_i32_0 = arith.constant 0 : i32
    %c0_i32_1 = arith.constant 0 : i32
    return %c0_i32, %c0_i32_0 : i32, i32
  }
  func.func @transform_5(%arg0: i32, %arg1: i32) -> (i32, i32) {
    %c0_i32 = arith.constant 0 : i32
    %c0_i32_0 = arith.constant 0 : i32
    return %arg0, %c0_i32 : i32, i32
  }
}

</mosaic_0001>

<llo_original>
// kernel: _ffn_impl.1
$region0: #{_ffn_impl.1}
  #allocation0 [shape = 'u32[]', space=smem, size = 0x4, offset = 0x4, fixed_abs, tag = 'smem constant byte address 0x4 - core index']
  #allocation1 [shape = 'u32[72,128]{1,0:T(1,128)}', space=vmem, size = 0x9000, scoped, tag = 'internal scratch']
  #allocation2 [shape = 'f32[8,32]{1,0:T(8,128)}', space=vmem, size = 0x1000, scoped, tag = 'scratch operand']
  %s0 = inlined_call_operand.vmem [shape: f32[16,32], index: 0, kind: input, shape index: {}]
  %s1 = inlined_call_operand.vmem [shape: f32[32,64], index: 1, kind: input, shape index: {}]
  %s2 = inlined_call_operand.vmem [shape: f32[1,64], index: 2, kind: input, shape index: {}]
  %s3 = inlined_call_operand.vmem [shape: f32[64,32], index: 3, kind: input, shape index: {}]
  %s4 = inlined_call_operand.vmem [shape: f32[1,32], index: 4, kind: input, shape index: {}]
  %s5 = inlined_call_operand.hbm [shape: f32[16,32], index: 5, kind: output, shape index: {}]
  %s6 = sld [smem:[#allocation0]]
  $region61: #{_ffn_impl.1} parent=0
    _
  %s8 = ssub.s32 1, %s6
  %s9 = scalar_select 0, %s8, %s6
  $region1: #{_ffn_impl.1} parent=0
    #allocation3 [shape = 'u8[8192]{0}', space=vmem, size = 0x2000, scoped, tag = 'output window, operand 0']
    #allocation4 [shape = 's32[2]{0}', space=sflag, size = 0x8, scoped, tag = 'scoped memory for _ffn_impl.1']
    %10 = vsyncpa [#allocation4], 0
    %s11 = scalar_lea.sflag [#allocation4], 1
    %12 = vsyncpa %s11, 0
    loop: start=0, step=1, limit=4
    $region2: #{_ffn_impl.1} parent=1 // loop_pre_header
      _
    $region3: #{_ffn_impl.1} parent=1 // loop_header
      %s14 = sphi 0, %s18
      %p15 = scmp.ge.s32.totalorder %s14, 4
      %s21 = sphi 0, %s33
      %s22 = sphi 0, %s29
      %s23 = sphi 0, %s21
      %s24 = sphi 0, %s22
      %s25 = sphi 0, %s23
      %s26 = sphi 0, %s24
      %s36 = sphi 0, %s38
      %s39 = sphi 0, %s36
      %s40 = sphi 0, %s39
      %s56 = sphi 0, %s40
      %s62 = sphi 0, %s64
      %s65 = sphi 0, %s62
      %s66 = sphi 0, %s65
      %s82 = sphi 0, %s66
      %s88 = sphi 0, %s90
      %s91 = sphi 0, %s88
      %s92 = sphi 0, %s91
      %s108 = sphi 0, %s92
      %s114 = sphi 0, %s116
      %s117 = sphi 0, %s114
      %s118 = sphi 0, %s117
      %s134 = sphi 0, %s118
      %s138 = sphi 0, %s138
      %s140 = sphi 0, %s138
      %s141 = sphi 0, %s140
      %s155 = sphi 0, %s141
      %s161 = sphi 0, %s163
      %s164 = sphi 0, %s161
      %s165 = sphi 0, %s164
      %s181 = sphi 0, %s165
    $region4: #{_ffn_impl.1} parent=1 // loop_header_branch
      %17 = sbr.rel (%p15) target = $region8
    $region5: #{_ffn_impl.1} parent=1 // loop_body
      %s19 = ssub.s32 %s14, 1
      %s20 = ssub.s32 %s14, 2
      %s27 = sadd.s32 1, %s22
      %p28 = scmp.ge.s32.totalorder %s27, 1
      %s29 = scalar_select %p28, 0, %s27
      %s30 = sadd.s32 1, %s21
      %s31 = scalar_select %p28, %s30, %s21
      %p32 = scmp.ge.s32.totalorder %s31, 2
      %s33 = scalar_select %p32, 0, %s31
      %s34 = ssub.s32 %s21, %s33
      %p35 = scmp.eq.s32.totalorder %s34, 0
      %s37 = sadd.s32 %s36, 1
      %s38 = scalar_select %p35, %s36, %s37
      %p41 = pneg %p35
      %p42 = scmp.eq.s32.totalorder %s14, 1
      %p43 = por %p41, %p42
      %p44 = scmp.ne.s32.totalorder %s36, %s39
      %p45 = scmp.eq.s32.totalorder %s14, 0
      %p46 = por %p44, %p45
      %p47 = scmp.ne.s32.totalorder %s36, %s39
      %p48 = scmp.eq.s32.totalorder %s19, 1
      %p49 = por %p47, %p48
      %p50 = scmp.ne.s32.totalorder %s39, %s40
      %p51 = scmp.eq.s32.totalorder %s19, 0
      %p52 = por %p50, %p51
      %p53 = scmp.ne.s32.totalorder %s39, %s40
      %p54 = scmp.eq.s32.totalorder %s20, 1
      %p55 = por %p53, %p54
      %p57 = scmp.ne.s32.totalorder %s40, %s56
      %p58 = scmp.eq.s32.totalorder %s20, 0
      %p59 = por %p57, %p58
      %s60 = ssub.s32 %s22, %s29
      %p61 = scmp.eq.s32.totalorder %s60, 0
      %s63 = sadd.s32 %s62, 1
      %s64 = scalar_select %p61, %s62, %s63
      %p67 = pneg %p61
      %p68 = scmp.eq.s32.totalorder %s14, 1
      %p69 = por %p67, %p68
      %p70 = scmp.ne.s32.totalorder %s62, %s65
      %p71 = scmp.eq.s32.totalorder %s14, 0
      %p72 = por %p70, %p71
      %p73 = scmp.ne.s32.totalorder %s62, %s65
      %p74 = scmp.eq.s32.totalorder %s19, 1
      %p75 = por %p73, %p74
      %p76 = scmp.ne.s32.totalorder %s65, %s66
      %p77 = scmp.eq.s32.totalorder %s19, 0
      %p78 = por %p76, %p77
      %p79 = scmp.ne.s32.totalorder %s65, %s66
      %p80 = scmp.eq.s32.totalorder %s20, 1
      %p81 = por %p79, %p80
      %p83 = scmp.ne.s32.totalorder %s66, %s82
      %p84 = scmp.eq.s32.totalorder %s20, 0
      %p85 = por %p83, %p84
      %s86 = ssub.s32 %s22, %s29
      %p87 = scmp.eq.s32.totalorder %s86, 0
      %s89 = sadd.s32 %s88, 1
      %s90 = scalar_select %p87, %s88, %s89
      %p93 = pneg %p87
      %p94 = scmp.eq.s32.totalorder %s14, 1
      %p95 = por %p93, %p94
      %p96 = scmp.ne.s32.totalorder %s88, %s91
      %p97 = scmp.eq.s32.totalorder %s14, 0
      %p98 = por %p96, %p97
      %p99 = scmp.ne.s32.totalorder %s88, %s91
      %p100 = scmp.eq.s32.totalorder %s19, 1
      %p101 = por %p99, %p100
      %p102 = scmp.ne.s32.totalorder %s91, %s92
      %p103 = scmp.eq.s32.totalorder %s19, 0
      %p104 = por %p102, %p103
      %p105 = scmp.ne.s32.totalorder %s91, %s92
      %p106 = scmp.eq.s32.totalorder %s20, 1
      %p107 = por %p105, %p106
      %p109 = scmp.ne.s32.totalorder %s92, %s108
      %p110 = scmp.eq.s32.totalorder %s20, 0
      %p111 = por %p109, %p110
      %s112 = ssub.s32 %s22, %s29
      %p113 = scmp.eq.s32.totalorder %s112, 0
      %s115 = sadd.s32 %s114, 1
      %s116 = scalar_select %p113, %s114, %s115
      %p119 = pneg %p113
      %p120 = scmp.eq.s32.totalorder %s14, 1
      %p121 = por %p119, %p120
      %p122 = scmp.ne.s32.totalorder %s114, %s117
      %p123 = scmp.eq.s32.totalorder %s14, 0
      %p124 = por %p122, %p123
      %p125 = scmp.ne.s32.totalorder %s114, %s117
      %p126 = scmp.eq.s32.totalorder %s19, 1
      %p127 = por %p125, %p126
      %p128 = scmp.ne.s32.totalorder %s117, %s118
      %p129 = scmp.eq.s32.totalorder %s19, 0
      %p130 = por %p128, %p129
      %p131 = scmp.ne.s32.totalorder %s117, %s118
      %p132 = scmp.eq.s32.totalorder %s20, 1
      %p133 = por %p131, %p132
      %p135 = scmp.ne.s32.totalorder %s118, %s134
      %p136 = scmp.eq.s32.totalorder %s20, 0
      %p137 = por %p135, %p136
      %s139 = sadd.s32 %s138, 1
      %p142 = scmp.eq.s32.totalorder %s14, 1
      %p143 = scmp.ne.s32.totalorder %s138, %s140
      %p144 = scmp.eq.s32.totalorder %s14, 0
      %p145 = por %p143, %p144
      %p146 = scmp.ne.s32.totalorder %s138, %s140
      %p147 = scmp.eq.s32.totalorder %s19, 1
      %p148 = por %p146, %p147
      %p149 = scmp.ne.s32.totalorder %s140, %s141
      %p150 = scmp.eq.s32.totalorder %s19, 0
      %p151 = por %p149, %p150
      %p152 = scmp.ne.s32.totalorder %s140, %s141
      %p153 = scmp.eq.s32.totalorder %s20, 1
      %p154 = por %p152, %p153
      %p156 = scmp.ne.s32.totalorder %s141, %s155
      %p157 = scmp.eq.s32.totalorder %s20, 0
      %p158 = por %p156, %p157
      %s159 = ssub.s32 %s21, %s33
      %p160 = scmp.eq.s32.totalorder %s159, 0
      %s162 = sadd.s32 %s161, 1
      %s163 = scalar_select %p160, %s161, %s162
      %p166 = pneg %p160
      %p167 = scmp.eq.s32.totalorder %s14, 1
      %p168 = por %p166, %p167
      %p169 = scmp.ne.s32.totalorder %s161, %s164
      %p170 = scmp.eq.s32.totalorder %s14, 0
      %p171 = por %p169, %p170
      %p172 = scmp.ne.s32.totalorder %s161, %s164
      %p173 = scmp.eq.s32.totalorder %s19, 1
      %p174 = por %p172, %p173
      %p175 = scmp.ne.s32.totalorder %s164, %s165
      %p176 = scmp.eq.s32.totalorder %s19, 0
      %p177 = por %p175, %p176
      %p178 = scmp.ne.s32.totalorder %s164, %s165
      %p179 = scmp.eq.s32.totalorder %s20, 1
      %p180 = por %p178, %p179
      %p182 = scmp.ne.s32.totalorder %s165, %s181
      %p183 = scmp.eq.s32.totalorder %s20, 0
      %p184 = por %p182, %p183
      %p185 = scmp.le.s32.totalorder 1, %s14
      %p186 = scmp.lt.s32.totalorder %s14, 3
      %p187 = pnand %p185, %p186
      %p188 = pneg %p187
      // Predicated region
      $region9: #{_ffn_impl.1} parent=5 // pred_check
        _
      $region10: #{_ffn_impl.1} parent=5 // pred_check_branch
        %190 = sbr.rel (%p187) target = $region12
      $region11: #{_ffn_impl.1} parent=5 // pred_region
        %s191 = ssub.s32 %s14, 1
        // Predicated region
        $region13: #{_ffn_impl.1} parent=11 // pred_check
          %p192 = pneg %p78
        $region14: #{_ffn_impl.1} parent=11 // pred_check_branch
          %194 = sbr.rel (%p192) target = $region16
        $region15: #{_ffn_impl.1} parent=11 // pred_region
          %p195 = scmp.lt.s32.totalorder %s24, 0
          %s196 = scalar_select %p195, %s24, 0
          %s197 = smul.addr %s196, 8
          %s198 = scalar_lea.vmem %s1, %s197
        $region16: #{_ffn_impl.1} parent=11 // pred_fallthru
          _
        // Predicated region
        $region17: #{_ffn_impl.1} parent=11 // pred_check
          %p199 = pneg %p104
        $region18: #{_ffn_impl.1} parent=11 // pred_check_branch
          %201 = sbr.rel (%p199) target = $region20
        $region19: #{_ffn_impl.1} parent=11 // pred_region
          %p202 = scmp.lt.s32.totalorder %s24, 0
          %s203 = scalar_select %p202, %s24, 0
          %s204 = scalar_lea.vmem %s2, %s203
        $region20: #{_ffn_impl.1} parent=11 // pred_fallthru
          _
        // Predicated region
        $region21: #{_ffn_impl.1} parent=11 // pred_check
          %p205 = pneg %p130
        $region22: #{_ffn_impl.1} parent=11 // pred_check_branch
          %207 = sbr.rel (%p205) target = $region24
        $region23: #{_ffn_impl.1} parent=11 // pred_region
          %s208 = smul.u32 8, %s24
          %p209 = scmp.lt.s32.totalorder %s208, 7
          %s210 = scalar_select %p209, %s208, 7
          %s211 = smul.addr %s210, 8
          %s212 = scalar_lea.vmem %s3, %s211
          %s213 = smul.u32 8, %s24
        $region24: #{_ffn_impl.1} parent=11 // pred_fallthru
          _
        // Predicated region
        $region25: #{_ffn_impl.1} parent=11 // pred_check
          %p214 = pneg %p151
        $region26: #{_ffn_impl.1} parent=11 // pred_check_branch
          %216 = sbr.rel (%p214) target = $region28
        $region27: #{_ffn_impl.1} parent=11 // pred_region
          _
        $region28: #{_ffn_impl.1} parent=11 // pred_fallthru
          _
      $region12: #{_ffn_impl.1} parent=5 // pred_fallthru
        _
      %p217 = scmp.lt.s32.totalorder %s14, 2
      // Predicated region
      $region29: #{_ffn_impl.1} parent=5 // pred_check
        %p218 = pneg %p217
      $region30: #{_ffn_impl.1} parent=5 // pred_check_branch
        %220 = sbr.rel (%p218) target = $region32
      $region31: #{_ffn_impl.1} parent=5 // pred_region
        // Predicated region
        $region33: #{_ffn_impl.1} parent=31 // pred_check
          %p221 = pneg %p46
        $region34: #{_ffn_impl.1} parent=31 // pred_check_branch
          %223 = sbr.rel (%p221) target = $region36
        $region35: #{_ffn_impl.1} parent=31 // pred_region
          %p224 = scmp.lt.s32.totalorder %s21, 1
          %s225 = scalar_select %p224, %s21, 1
          %s226 = smul.addr %s225, 8
          %s227 = scalar_lea.vmem %s0, %s226
        $region36: #{_ffn_impl.1} parent=31 // pred_fallthru
          _
      $region32: #{_ffn_impl.1} parent=5 // pred_fallthru
        _
      %p228 = scmp.le.s32.totalorder 1, %s14
      %p229 = scmp.lt.s32.totalorder %s14, 3
      %p230 = pnand %p228, %p229
      %p231 = pneg %p230
      // Predicated region
      $region37: #{_ffn_impl.1} parent=5 // pred_check
        _
      $region38: #{_ffn_impl.1} parent=5 // pred_check_branch
        %233 = sbr.rel (%p230) target = $region40
      $region39: #{_ffn_impl.1} parent=5 // pred_region
        %s234 = ssub.s32 %s14, 1
        %p235 = scmp.lt.s32.totalorder %s23, 1
        %s236 = scalar_select %p235, %s23, 1
        %s237 = smul.addr %s236, 8
        %s238 = scalar_lea.vmem %s0, %s237
        %p239 = pneg %p52
        %p240 = pneg %p49
        %p241 = scmp.lt.s32.totalorder %s24, 0
        %s242 = scalar_select %p241, %s24, 0
        %s243 = smul.addr %s242, 8
        %s244 = scalar_lea.vmem %s1, %s243
        %p245 = pneg %p78
        %p246 = pneg %p75
        %p247 = scmp.lt.s32.totalorder %s24, 0
        %s248 = scalar_select %p247, %s24, 0
        %s249 = scalar_lea.vmem %s2, %s248
        %p250 = pneg %p104
        %p251 = pneg %p101
        %s252 = smul.u32 8, %s24
        %p253 = scmp.lt.s32.totalorder %s252, 7
        %s254 = scalar_select %p253, %s252, 7
        %s255 = smul.addr %s254, 8
        %s256 = scalar_lea.vmem %s3, %s255
        %p257 = pneg %p130
        %p258 = pneg %p127
        %p259 = pneg %p151
        %p260 = pneg %p148
        %p261 = pneg %p177
        %p262 = pneg %p174
        %s263 = sand.u32 %s164, 1
        %s264 = scalar_lea.sflag [#allocation4], %s263
        %s265 = sand.u32 %s164, 1
        %s266 = smul.addr %s265, 8
        %s267 = scalar_lea.vmem [#allocation3], %s266
        %p268 = scmp.lt.s32.totalorder %s23, 1
        %s269 = scalar_select %p268, %s23, 1
        %s270 = smul.addr %s269, 8
        %s271 = scalar_lea.vmem %s0, %s270
        %p272 = scmp.lt.s32.totalorder %s24, 0
        %s273 = scalar_select %p272, %s24, 0
        %s274 = smul.addr %s273, 8
        %s275 = scalar_lea.vmem %s1, %s274
        %p276 = scmp.lt.s32.totalorder %s24, 0
        %s277 = scalar_select %p276, %s24, 0
        %s278 = scalar_lea.vmem %s2, %s277
        %s279 = smul.u32 8, %s24
        %p280 = scmp.lt.s32.totalorder %s279, 7
        %s281 = scalar_select %p280, %s279, 7
        %s282 = smul.addr %s281, 8
        %s283 = scalar_lea.vmem %s3, %s282
        %s284 = smul.u32 8, %s24
        %p285 = scmp.eq.s32.totalorder %s24, 0
        // Predicated region
        $region41: #{_ffn_impl.1} parent=39 // pred_check
          %p286 = pneg %p285
        $region42: #{_ffn_impl.1} parent=39 // pred_check_branch
          %288 = sbr.rel (%p286) target = $region44
        $region43: #{_ffn_impl.1} parent=39 // pred_region
          %vm289 = vcmask 261120
          %290 = vst.msk [vmem:[#allocation2] sm:$0xff] %vm289, 0.0
        $region44: #{_ffn_impl.1} parent=39 // pred_fallthru
          _
        %v291 = vld [vmem:[%s271] sm:$0xff]
        %v292 = vld [vmem:[%s275] sm:$0xff]
        %v293 = vld [vmem:[%s275 + $0x8] sm:$0xff]
        %v294 = vld [vmem:[%s275 + $0x10] sm:$0xff]
        %v295 = vld [vmem:[%s275 + $0x18] sm:$0xff]
        %v296 = vld [vmem:[%s278] sm:$0x1]
        %v298 = vperm.slane %v296, 0
        %vm300 = vcmask 261120
        %v302 = vsel %vm300, %v291, 0
        %304 = vmatpush.msra.mxu0 0.0
        %305 = vmatpush.msra.mxu0 0.0
        %306 = vmatpush.msra.mxu0 0.0
        %307 = vmatpush.msra.mxu0 0.0
        %308 = vmatpush.msra.mxu0 0.0
        %309 = vmatpush.msra.mxu0 0.0
        %310 = vmatpush.msra.mxu0 0.0
        %311 = vmatpush.msra.mxu0 0.0
        %312 = vmatpush.msra.mxu0 0.0
        %313 = vmatpush.msra.mxu0 0.0
        %314 = vmatpush.msra.mxu0 0.0
        %315 = vmatpush.msra.mxu0 0.0
        %316 = vmatpush.msra.mxu0 %v295
        %317 = vmatpush.msra.mxu0 %v294
        %318 = vmatpush.msra.mxu0 %v293
        %319 = vmatpush.msra.mxu0 %v292
        %320 = vmatmul.f32.gmra.mxu0 %v302
        %v321 = vpop.f32.mrf.mxu0
        %v322 = vadd.f32 %v298, %v321
        %323 = vdwg.mxu0
        %v324 = vmax.f32 %v322, 0.0
        %v325 = vld [vmem:[#allocation2] sm:$0xff]
        %v326 = vld [vmem:[%s283] sm:$0xff]
        %v327 = vld [vmem:[%s283 + $0x8] sm:$0xff]
        %v328 = vld [vmem:[%s283 + $0x10] sm:$0xff]
        %v329 = vld [vmem:[%s283 + $0x18] sm:$0xff]
        %v330 = vld [vmem:[%s283 + $0x20] sm:$0xff]
        %v331 = vld [vmem:[%s283 + $0x28] sm:$0xff]
        %v332 = vld [vmem:[%s283 + $0x30] sm:$0xff]
        %v333 = vld [vmem:[%s283 + $0x38] sm:$0xff]
        %vm334 = vcmask 523264
        %v336 = vsel %vm334, %v324, 0
        %338 = vmatpush.msra.mxu0 0.0
        %339 = vmatpush.msra.mxu0 0.0
        %340 = vmatpush.msra.mxu0 0.0
        %341 = vmatpush.msra.mxu0 0.0
        %342 = vmatpush.msra.mxu0 0.0
        %343 = vmatpush.msra.mxu0 0.0
        %344 = vmatpush.msra.mxu0 0.0
        %345 = vmatpush.msra.mxu0 0.0
        %346 = vmatpush.msra.mxu0 %v333
        %347 = vmatpush.msra.mxu0 %v332
        %348 = vmatpush.msra.mxu0 %v331
        %349 = vmatpush.msra.mxu0 %v330
        %350 = vmatpush.msra.mxu0 %v329
        %351 = vmatpush.msra.mxu0 %v328
        %352 = vmatpush.msra.mxu0 %v327
        %353 = vmatpush.msra.mxu0 %v326
        %354 = vmatmul.f32.gmra.mxu0 %v336
        %v355 = vpop.f32.mrf.mxu0
        %v356 = vadd.f32 0.0, %v355
        %357 = vdwg.mxu0
        %v358 = vadd.f32 %v325, %v356
        %359 = vst.msk [vmem:[#allocation2] sm:$0xff] %vm300, %v358
        // Predicated region
        $region45: #{_ffn_impl.1} parent=39 // pred_check
          %p360 = pneg %p285
        $region46: #{_ffn_impl.1} parent=39 // pred_check_branch
          %362 = sbr.rel (%p360) target = $region48
        $region47: #{_ffn_impl.1} parent=39 // pred_region
          %v363 = vld [vmem:[#allocation2] sm:$0xff]
          %v364 = vld [vmem:[%s4] sm:$0x1]
          %v366 = vperm.slane %v364, 0
          %v368 = vadd.f32 %v363, %v366
          %369 = vst.msk [vmem:[%s267] sm:$0xff] %vm300, %v368
        $region48: #{_ffn_impl.1} parent=39 // pred_fallthru
          _
        %s370 = sand.u32 %s164, 1
        %s371 = scalar_lea.sflag [#allocation4], %s370
        %s372 = sand.u32 %s164, 1
        %s373 = smul.addr %s372, 8
        %s374 = scalar_lea.vmem [#allocation3], %s373
        // Predicated region
        $region49: #{_ffn_impl.1} parent=39 // pred_check
          %p375 = pneg %p174
        $region50: #{_ffn_impl.1} parent=39 // pred_check_branch
          %377 = sbr.rel (%p375) target = $region52
        $region51: #{_ffn_impl.1} parent=39 // pred_region
          %379 = vsyncadd %s371, 0
          %s380 = smul.addr %s23, 8
          %s381 = scalar_lea.hbm %s5, %s380
          %s383 = sshll.u32 %s374, 4
          %s384 = int_to_ptr.vmem [resolvable:$true] %s383
          %s385 = sshll.u32 %s381, 4
          %s386 = int_to_ptr.hbm [resolvable:$true] %s385
          %388 = dma.vmem_to_hbm [thread:$0]  %s384, 128, %s386, %s371
        $region52: #{_ffn_impl.1} parent=39 // pred_fallthru
          _
      $region40: #{_ffn_impl.1} parent=5 // pred_fallthru
        _
      %p389 = scmp.le.s32.totalorder 2, %s14
      // Predicated region
      $region53: #{_ffn_impl.1} parent=5 // pred_check
        %p390 = pneg %p389
      $region54: #{_ffn_impl.1} parent=5 // pred_check_branch
        %392 = sbr.rel (%p390) target = $region56
      $region55: #{_ffn_impl.1} parent=5 // pred_region
        %s393 = ssub.s32 %s14, 2
        // Predicated region
        $region57: #{_ffn_impl.1} parent=55 // pred_check
          %p394 = pneg %p180
        $region58: #{_ffn_impl.1} parent=55 // pred_check_branch
          %396 = sbr.rel (%p394) target = $region60
        $region59: #{_ffn_impl.1} parent=55 // pred_region
          %s397 = sand.u32 %s165, 1
          %s398 = scalar_lea.sflag [#allocation4], %s397
          %s399 = sand.u32 %s165, 1
          %s400 = smul.addr %s399, 8
          %s401 = scalar_lea.vmem [#allocation3], %s400
          %403 = dma.done %s398, 128
        $region60: #{_ffn_impl.1} parent=55 // pred_fallthru
          _
      $region56: #{_ffn_impl.1} parent=5 // pred_fallthru
        _
    $region6: #{_ffn_impl.1} parent=1 // loop_footer
      %s18 = sadd.s32 1, %s14
    $region7: #{_ffn_impl.1} parent=1 // loop_footer_branch
      %13 = sbr.rel target = $region3
    $region8: #{_ffn_impl.1} parent=1 // loop_exit
      _
    %404 = vsyncpa [#allocation4], 1
    %s405 = scalar_lea.sflag [#allocation4], 1
    %406 = vsyncpa %s405, 1

</llo_original>
